<compile_context>
chip_gen: v6e
topology: v6e:2x2x1
jax: 0.10.0
libtpu: 0.0.40
codegen_flags: <defaults>
</compile_context>

<pallas_src>
import jax
import jax.numpy as jnp
import numpy as np
from jax.experimental import pallas as pl
from jax.experimental.pallas import tpu as pltpu


def lstm_kernel(x_ref, wih_ref, whh_ref, b_ref, wfc_ref, bfc_ref,
                h0_ref, c0_ref,
                y_ref, hn_ref, cn_ref):
    B, H = h0_ref.shape              # B is already padded to a sublane multiple
    SB, _ = x_ref.shape
    S = SB // B

    # 1) Hoisted input projection for ALL time steps: one (S*B, I)@(I, 4H) matmul.
    #    x_ref is already bf16 (wrapper-side cast).
    gx = jnp.dot(x_ref[...], wih_ref[...],
                 preferred_element_type=jnp.float32) + b_ref[...]      # (S*B, 4H) f32

    h = h0_ref[...]                                                    # (B, H) f32
    c = c0_ref[...]                                                    # (B, H) f32

    # 2) Sequential recurrence, fully unrolled (S is small and static).  Only the
    #    recurrent matmul + gate math remain on the serial critical path.
    hs = []
    for t in range(S):
        # Aligned sublane slice (B is a multiple of 8, t*B is static).
        gates = gx[t * B:(t + 1) * B, :] + jnp.dot(
            h.astype(jnp.bfloat16), whh_ref[...],
            preferred_element_type=jnp.float32)                        # (B, 4H)
        # One sigmoid pass + one tanh pass over the whole gates vreg, then slice.
        sig = jax.nn.sigmoid(gates)
        th = jnp.tanh(gates)
        i_g = sig[:, 0 * H:1 * H]
        f_g = sig[:, 1 * H:2 * H]
        g_g = th[:, 2 * H:3 * H]
        o_g = sig[:, 3 * H:4 * H]
        c = f_g * c + i_g * g_g
        h = o_g * jnp.tanh(c)
        hs.append(h)                                                   # stays in vregs

    # 3) Final state written once (not every step).
    hn_ref[...] = h
    cn_ref[...] = c

    # 4) Batched FC head: one (S*B, H)@(H, I) matmul + one wide store.
    h_all = jnp.concatenate(hs, axis=0)                                # (S*B, H)
    y_ref[...] = jnp.dot(h_all.astype(jnp.bfloat16), wfc_ref[...],
                         preferred_element_type=jnp.float32) + bfc_ref[...]


def lstm_forward(x, params, state):
    """x: (S, B, I) f32; state: (h0, c0) each (1, B, H).  Returns (y, (hn, cn))."""
    wih_T, whh_T, b, wfc_T, bfc = params
    S, B, I = x.shape
    H = whh_T.shape[0]
    # Gate lane-slices assume 4H maps onto whole 128-lane groups.
    assert (4 * H) % 128 == 0, "pad H so 4H is a multiple of 128 lanes"

    h0 = state[0].reshape(B, H)
    c0 = state[1].reshape(B, H)

    # Pad batch to a full 8-sublane tile so all per-step slices/stores are aligned.
    PB = ((B + 7) // 8) * 8
    if PB != B:
        x = jnp.pad(x, ((0, 0), (0, PB - B), (0, 0)))
        h0 = jnp.pad(h0, ((0, PB - B), (0, 0)))
        c0 = jnp.pad(c0, ((0, PB - B), (0, 0)))

    x2d = x.reshape(S * PB, I).astype(jnp.bfloat16)    # XLA-side reshape/cast (cheap)

    vmem = pl.BlockSpec(memory_space=pltpu.MemorySpace.VMEM)

    y2d, hn, cn = pl.pallas_call(
        lstm_kernel,
        out_shape=(
            jax.ShapeDtypeStruct((S * PB, I), jnp.float32),
            jax.ShapeDtypeStruct((PB, H), jnp.float32),
            jax.ShapeDtypeStruct((PB, H), jnp.float32),
        ),
        in_specs=[vmem] * 8,
        out_specs=(vmem, vmem, vmem),
    )(x2d, wih_T, whh_T, b, wfc_T, bfc, h0, c0)

    y = y2d.reshape(S, PB, I)[:, :B, :]
    return y, (hn[:B].reshape(1, B, H), cn[:B].reshape(1, B, H))


def lstm_ref(x, params, state):
    """Pure-JAX reference (mirrors torch.nn.LSTM + Linear forward, same casts)."""
    wih_T, whh_T, b, wfc_T, bfc = params
    H = whh_T.shape[0]
    B = x.shape[1]
    h = state[0].reshape(B, H)
    c = state[1].reshape(B, H)

    def step(carry, x_t):
        h, c = carry
        gates = (jnp.dot(x_t.astype(jnp.bfloat16), wih_T,
                         preferred_element_type=jnp.float32)
                 + jnp.dot(h.astype(jnp.bfloat16), whh_T,
                           preferred_element_type=jnp.float32) + b)
        i_g = jax.nn.sigmoid(gates[:, 0 * H:1 * H])
        f_g = jax.nn.sigmoid(gates[:, 1 * H:2 * H])
        g_g = jnp.tanh(gates[:, 2 * H:3 * H])
        o_g = jax.nn.sigmoid(gates[:, 3 * H:4 * H])
        c_new = f_g * c + i_g * g_g
        h_new = o_g * jnp.tanh(c_new)
        y_t = jnp.dot(h_new.astype(jnp.bfloat16), wfc_T,
                      preferred_element_type=jnp.float32) + bfc
        return (h_new, c_new), y_t

    (hn, cn), y = jax.lax.scan(step, (h, c), x)
    return y, (hn.reshape(1, B, H), cn.reshape(1, B, H))


def init_params(key, input_size, hidden_size):
    """Deterministic init matching PyTorch shapes (uniform +-1/sqrt(H))."""
    I, H = input_size, hidden_size
    k = 1.0 / np.sqrt(H)
    ks = jax.random.split(key, 6)
    w_ih = jax.random.uniform(ks[0], (4 * H, I), jnp.float32, -k, k)   # torch: (4H, I)
    w_hh = jax.random.uniform(ks[1], (4 * H, H), jnp.float32, -k, k)   # torch: (4H, H)
    b_ih = jax.random.uniform(ks[2], (4 * H,), jnp.float32, -k, k)
    b_hh = jax.random.uniform(ks[3], (4 * H,), jnp.float32, -k, k)
    w_fc = jax.random.uniform(ks[4], (I, H), jnp.float32, -k, k)       # torch Linear: (I, H)
    b_fc = jax.random.uniform(ks[5], (I,), jnp.float32, -k, k)
    # Pre-transpose / fold for the kernel; weights in bf16 (native MXU mode).
    return (w_ih.T.astype(jnp.bfloat16),
            w_hh.T.astype(jnp.bfloat16),
            (b_ih + b_hh).reshape(1, 4 * H),
            w_fc.T.astype(jnp.bfloat16),
            b_fc.reshape(1, I))


if __name__ == "__main__":
    SEQ, BATCH, INPUT, HIDDEN = 8, 2, 16, 32

    root = jax.random.PRNGKey(0)
    k_p, k_x, k_h, k_c = jax.random.split(root, 4)

    params = init_params(k_p, INPUT, HIDDEN)
    x = jax.random.normal(k_x, (SEQ, BATCH, INPUT), jnp.float32)
    h0 = jax.random.normal(k_h, (1, BATCH, HIDDEN), jnp.float32)
    c0 = jax.random.normal(k_c, (1, BATCH, HIDDEN), jnp.float32)

    y, (hn, cn) = lstm_forward(x, params, (h0, c0))
    jax.block_until_ready((y, hn, cn))

    y_r, (hn_r, cn_r) = lstm_ref(x, params, (h0, c0))
    np.testing.assert_allclose(np.asarray(y), np.asarray(y_r), rtol=2e-3, atol=1e-3)
    np.testing.assert_allclose(np.asarray(hn), np.asarray(hn_r), rtol=2e-3, atol=1e-3)
    np.testing.assert_allclose(np.asarray(cn), np.asarray(cn_r), rtol=2e-3, atol=1e-3)

    print("KERNEL_OK")
</pallas_src>

<mosaic_0001>
module attributes {stable_mosaic.version = 11 : i64} {
  func.func @lstm_kernel(%arg0: memref<64x16xbf16, #tpu.memory_space<vmem>>, %arg1: memref<16x128xbf16, #tpu.memory_space<vmem>>, %arg2: memref<32x128xbf16, #tpu.memory_space<vmem>>, %arg3: memref<1x128xf32, #tpu.memory_space<vmem>>, %arg4: memref<32x16xbf16, #tpu.memory_space<vmem>>, %arg5: memref<1x16xf32, #tpu.memory_space<vmem>>, %arg6: memref<8x32xf32, #tpu.memory_space<vmem>>, %arg7: memref<8x32xf32, #tpu.memory_space<vmem>>, %arg8: memref<64x16xf32, #tpu.memory_space<vmem>>, %arg9: memref<8x32xf32, #tpu.memory_space<vmem>>, %arg10: memref<8x32xf32, #tpu.memory_space<vmem>>) attributes {dimension_semantics = [], scalar_prefetch = 0 : i64, scratch_operands = 0 : i64, tpu.core_type = #tpu.core_type<tc>} {
    %c0 = arith.constant 0 : index
    %c0_0 = arith.constant 0 : index
    %0 = vector.load %arg0[%c0, %c0_0] : memref<64x16xbf16, #tpu.memory_space<vmem>>, vector<64x16xbf16>
    %c0_1 = arith.constant 0 : index
    %c0_2 = arith.constant 0 : index
    %1 = vector.load %arg1[%c0_1, %c0_2] : memref<16x128xbf16, #tpu.memory_space<vmem>>, vector<16x128xbf16>
    %cst = arith.constant dense<0.000000e+00> : vector<64x128xf32>
    %2 = tpu.matmul %0, %1, %cst {dimension_numbers = #tpu.dot_dimension_numbers<[1], [0], [0], [1], [0, 0, 1, 1], [], []>} : vector<64x16xbf16>, vector<16x128xbf16>, vector<64x128xf32> -> vector<64x128xf32>
    %c0_3 = arith.constant 0 : index
    %c0_4 = arith.constant 0 : index
    %3 = vector.load %arg3[%c0_3, %c0_4] : memref<1x128xf32, #tpu.memory_space<vmem>>, vector<1x128xf32>
    %4 = vector.broadcast %3 : vector<1x128xf32> to vector<64x128xf32>
    %5 = arith.addf %2, %4 : vector<64x128xf32>
    %c0_5 = arith.constant 0 : index
    %c0_6 = arith.constant 0 : index
    %6 = vector.load %arg6[%c0_5, %c0_6] : memref<8x32xf32, #tpu.memory_space<vmem>>, vector<8x32xf32>
    %c0_7 = arith.constant 0 : index
    %c0_8 = arith.constant 0 : index
    %7 = vector.load %arg7[%c0_7, %c0_8] : memref<8x32xf32, #tpu.memory_space<vmem>>, vector<8x32xf32>
    %8 = vector.extract_strided_slice %5 {offsets = [0, 0], sizes = [8, 128], strides = [1, 1]} : vector<64x128xf32> to vector<8x128xf32>
    %9 = arith.truncf %6 : vector<8x32xf32> to vector<8x32xbf16>
    %c0_9 = arith.constant 0 : index
    %c0_10 = arith.constant 0 : index
    %10 = vector.load %arg2[%c0_9, %c0_10] : memref<32x128xbf16, #tpu.memory_space<vmem>>, vector<32x128xbf16>
    %cst_11 = arith.constant dense<0.000000e+00> : vector<8x128xf32>
    %11 = tpu.matmul %9, %10, %cst_11 {dimension_numbers = #tpu.dot_dimension_numbers<[1], [0], [0], [1], [0, 0, 1, 1], [], []>} : vector<8x32xbf16>, vector<32x128xbf16>, vector<8x128xf32> -> vector<8x128xf32>
    %12 = arith.addf %8, %11 : vector<8x128xf32>
    %13 = arith.negf %12 : vector<8x128xf32>
    %14 = math.exp %13 : vector<8x128xf32>
    %cst_12 = arith.constant 1.000000e+00 : f32
    %15 = vector.broadcast %cst_12 : f32 to vector<8x128xf32>
    %16 = arith.addf %15, %14 : vector<8x128xf32>
    %17 = arith.divf %15, %16 : vector<8x128xf32>
    %18 = math.tanh %12 : vector<8x128xf32>
    %19 = vector.extract_strided_slice %17 {offsets = [0, 0], sizes = [8, 32], strides = [1, 1]} : vector<8x128xf32> to vector<8x32xf32>
    %20 = vector.extract_strided_slice %17 {offsets = [0, 32], sizes = [8, 32], strides = [1, 1]} : vector<8x128xf32> to vector<8x32xf32>
    %21 = vector.extract_strided_slice %18 {offsets = [0, 64], sizes = [8, 32], strides = [1, 1]} : vector<8x128xf32> to vector<8x32xf32>
    %22 = vector.extract_strided_slice %17 {offsets = [0, 96], sizes = [8, 32], strides = [1, 1]} : vector<8x128xf32> to vector<8x32xf32>
    %23 = arith.mulf %20, %7 : vector<8x32xf32>
    %24 = arith.mulf %19, %21 : vector<8x32xf32>
    %25 = arith.addf %23, %24 : vector<8x32xf32>
    %26 = math.tanh %25 : vector<8x32xf32>
    %27 = arith.mulf %22, %26 : vector<8x32xf32>
    %28 = vector.extract_strided_slice %5 {offsets = [8, 0], sizes = [8, 128], strides = [1, 1]} : vector<64x128xf32> to vector<8x128xf32>
    %29 = arith.truncf %27 : vector<8x32xf32> to vector<8x32xbf16>
    %c0_13 = arith.constant 0 : index
    %c0_14 = arith.constant 0 : index
    %30 = vector.load %arg2[%c0_13, %c0_14] : memref<32x128xbf16, #tpu.memory_space<vmem>>, vector<32x128xbf16>
    %cst_15 = arith.constant dense<0.000000e+00> : vector<8x128xf32>
    %31 = tpu.matmul %29, %30, %cst_15 {dimension_numbers = #tpu.dot_dimension_numbers<[1], [0], [0], [1], [0, 0, 1, 1], [], []>} : vector<8x32xbf16>, vector<32x128xbf16>, vector<8x128xf32> -> vector<8x128xf32>
    %32 = arith.addf %28, %31 : vector<8x128xf32>
    %33 = arith.negf %32 : vector<8x128xf32>
    %34 = math.exp %33 : vector<8x128xf32>
    %cst_16 = arith.constant 1.000000e+00 : f32
    %35 = vector.broadcast %cst_16 : f32 to vector<8x128xf32>
    %36 = arith.addf %35, %34 : vector<8x128xf32>
    %37 = arith.divf %35, %36 : vector<8x128xf32>
    %38 = math.tanh %32 : vector<8x128xf32>
    %39 = vector.extract_strided_slice %37 {offsets = [0, 0], sizes = [8, 32], strides = [1, 1]} : vector<8x128xf32> to vector<8x32xf32>
    %40 = vector.extract_strided_slice %37 {offsets = [0, 32], sizes = [8, 32], strides = [1, 1]} : vector<8x128xf32> to vector<8x32xf32>
    %41 = vector.extract_strided_slice %38 {offsets = [0, 64], sizes = [8, 32], strides = [1, 1]} : vector<8x128xf32> to vector<8x32xf32>
    %42 = vector.extract_strided_slice %37 {offsets = [0, 96], sizes = [8, 32], strides = [1, 1]} : vector<8x128xf32> to vector<8x32xf32>
    %43 = arith.mulf %40, %25 : vector<8x32xf32>
    %44 = arith.mulf %39, %41 : vector<8x32xf32>
    %45 = arith.addf %43, %44 : vector<8x32xf32>
    %46 = math.tanh %45 : vector<8x32xf32>
    %47 = arith.mulf %42, %46 : vector<8x32xf32>
    %48 = vector.extract_strided_slice %5 {offsets = [16, 0], sizes = [8, 128], strides = [1, 1]} : vector<64x128xf32> to vector<8x128xf32>
    %49 = arith.truncf %47 : vector<8x32xf32> to vector<8x32xbf16>
    %c0_17 = arith.constant 0 : index
    %c0_18 = arith.constant 0 : index
    %50 = vector.load %arg2[%c0_17, %c0_18] : memref<32x128xbf16, #tpu.memory_space<vmem>>, vector<32x128xbf16>
    %cst_19 = arith.constant dense<0.000000e+00> : vector<8x128xf32>
    %51 = tpu.matmul %49, %50, %cst_19 {dimension_numbers = #tpu.dot_dimension_numbers<[1], [0], [0], [1], [0, 0, 1, 1], [], []>} : vector<8x32xbf16>, vector<32x128xbf16>, vector<8x128xf32> -> vector<8x128xf32>
    %52 = arith.addf %48, %51 : vector<8x128xf32>
    %53 = arith.negf %52 : vector<8x128xf32>
    %54 = math.exp %53 : vector<8x128xf32>
    %cst_20 = arith.constant 1.000000e+00 : f32
    %55 = vector.broadcast %cst_20 : f32 to vector<8x128xf32>
    %56 = arith.addf %55, %54 : vector<8x128xf32>
    %57 = arith.divf %55, %56 : vector<8x128xf32>
    %58 = math.tanh %52 : vector<8x128xf32>
    %59 = vector.extract_strided_slice %57 {offsets = [0, 0], sizes = [8, 32], strides = [1, 1]} : vector<8x128xf32> to vector<8x32xf32>
    %60 = vector.extract_strided_slice %57 {offsets = [0, 32], sizes = [8, 32], strides = [1, 1]} : vector<8x128xf32> to vector<8x32xf32>
    %61 = vector.extract_strided_slice %58 {offsets = [0, 64], sizes = [8, 32], strides = [1, 1]} : vector<8x128xf32> to vector<8x32xf32>
    %62 = vector.extract_strided_slice %57 {offsets = [0, 96], sizes = [8, 32], strides = [1, 1]} : vector<8x128xf32> to vector<8x32xf32>
    %63 = arith.mulf %60, %45 : vector<8x32xf32>
    %64 = arith.mulf %59, %61 : vector<8x32xf32>
    %65 = arith.addf %63, %64 : vector<8x32xf32>
    %66 = math.tanh %65 : vector<8x32xf32>
    %67 = arith.mulf %62, %66 : vector<8x32xf32>
    %68 = vector.extract_strided_slice %5 {offsets = [24, 0], sizes = [8, 128], strides = [1, 1]} : vector<64x128xf32> to vector<8x128xf32>
    %69 = arith.truncf %67 : vector<8x32xf32> to vector<8x32xbf16>
    %c0_21 = arith.constant 0 : index
    %c0_22 = arith.constant 0 : index
    %70 = vector.load %arg2[%c0_21, %c0_22] : memref<32x128xbf16, #tpu.memory_space<vmem>>, vector<32x128xbf16>
    %cst_23 = arith.constant dense<0.000000e+00> : vector<8x128xf32>
    %71 = tpu.matmul %69, %70, %cst_23 {dimension_numbers = #tpu.dot_dimension_numbers<[1], [0], [0], [1], [0, 0, 1, 1], [], []>} : vector<8x32xbf16>, vector<32x128xbf16>, vector<8x128xf32> -> vector<8x128xf32>
    %72 = arith.addf %68, %71 : vector<8x128xf32>
    %73 = arith.negf %72 : vector<8x128xf32>
    %74 = math.exp %73 : vector<8x128xf32>
    %cst_24 = arith.constant 1.000000e+00 : f32
    %75 = vector.broadcast %cst_24 : f32 to vector<8x128xf32>
    %76 = arith.addf %75, %74 : vector<8x128xf32>
    %77 = arith.divf %75, %76 : vector<8x128xf32>
    %78 = math.tanh %72 : vector<8x128xf32>
    %79 = vector.extract_strided_slice %77 {offsets = [0, 0], sizes = [8, 32], strides = [1, 1]} : vector<8x128xf32> to vector<8x32xf32>
    %80 = vector.extract_strided_slice %77 {offsets = [0, 32], sizes = [8, 32], strides = [1, 1]} : vector<8x128xf32> to vector<8x32xf32>
    %81 = vector.extract_strided_slice %78 {offsets = [0, 64], sizes = [8, 32], strides = [1, 1]} : vector<8x128xf32> to vector<8x32xf32>
    %82 = vector.extract_strided_slice %77 {offsets = [0, 96], sizes = [8, 32], strides = [1, 1]} : vector<8x128xf32> to vector<8x32xf32>
    %83 = arith.mulf %80, %65 : vector<8x32xf32>
    %84 = arith.mulf %79, %81 : vector<8x32xf32>
    %85 = arith.addf %83, %84 : vector<8x32xf32>
    %86 = math.tanh %85 : vector<8x32xf32>
    %87 = arith.mulf %82, %86 : vector<8x32xf32>
    %88 = vector.extract_strided_slice %5 {offsets = [32, 0], sizes = [8, 128], strides = [1, 1]} : vector<64x128xf32> to vector<8x128xf32>
    %89 = arith.truncf %87 : vector<8x32xf32> to vector<8x32xbf16>
    %c0_25 = arith.constant 0 : index
    %c0_26 = arith.constant 0 : index
    %90 = vector.load %arg2[%c0_25, %c0_26] : memref<32x128xbf16, #tpu.memory_space<vmem>>, vector<32x128xbf16>
    %cst_27 = arith.constant dense<0.000000e+00> : vector<8x128xf32>
    %91 = tpu.matmul %89, %90, %cst_27 {dimension_numbers = #tpu.dot_dimension_numbers<[1], [0], [0], [1], [0, 0, 1, 1], [], []>} : vector<8x32xbf16>, vector<32x128xbf16>, vector<8x128xf32> -> vector<8x128xf32>
    %92 = arith.addf %88, %91 : vector<8x128xf32>
    %93 = arith.negf %92 : vector<8x128xf32>
    %94 = math.exp %93 : vector<8x128xf32>
    %cst_28 = arith.constant 1.000000e+00 : f32
    %95 = vector.broadcast %cst_28 : f32 to vector<8x128xf32>
    %96 = arith.addf %95, %94 : vector<8x128xf32>
    %97 = arith.divf %95, %96 : vector<8x128xf32>
    %98 = math.tanh %92 : vector<8x128xf32>
    %99 = vector.extract_strided_slice %97 {offsets = [0, 0], sizes = [8, 32], strides = [1, 1]} : vector<8x128xf32> to vector<8x32xf32>
    %100 = vector.extract_strided_slice %97 {offsets = [0, 32], sizes = [8, 32], strides = [1, 1]} : vector<8x128xf32> to vector<8x32xf32>
    %101 = vector.extract_strided_slice %98 {offsets = [0, 64], sizes = [8, 32], strides = [1, 1]} : vector<8x128xf32> to vector<8x32xf32>
    %102 = vector.extract_strided_slice %97 {offsets = [0, 96], sizes = [8, 32], strides = [1, 1]} : vector<8x128xf32> to vector<8x32xf32>
    %103 = arith.mulf %100, %85 : vector<8x32xf32>
    %104 = arith.mulf %99, %101 : vector<8x32xf32>
    %105 = arith.addf %103, %104 : vector<8x32xf32>
    %106 = math.tanh %105 : vector<8x32xf32>
    %107 = arith.mulf %102, %106 : vector<8x32xf32>
    %108 = vector.extract_strided_slice %5 {offsets = [40, 0], sizes = [8, 128], strides = [1, 1]} : vector<64x128xf32> to vector<8x128xf32>
    %109 = arith.truncf %107 : vector<8x32xf32> to vector<8x32xbf16>
    %c0_29 = arith.constant 0 : index
    %c0_30 = arith.constant 0 : index
    %110 = vector.load %arg2[%c0_29, %c0_30] : memref<32x128xbf16, #tpu.memory_space<vmem>>, vector<32x128xbf16>
    %cst_31 = arith.constant dense<0.000000e+00> : vector<8x128xf32>
    %111 = tpu.matmul %109, %110, %cst_31 {dimension_numbers = #tpu.dot_dimension_numbers<[1], [0], [0], [1], [0, 0, 1, 1], [], []>} : vector<8x32xbf16>, vector<32x128xbf16>, vector<8x128xf32> -> vector<8x128xf32>
    %112 = arith.addf %108, %111 : vector<8x128xf32>
    %113 = arith.negf %112 : vector<8x128xf32>
    %114 = math.exp %113 : vector<8x128xf32>
    %cst_32 = arith.constant 1.000000e+00 : f32
    %115 = vector.broadcast %cst_32 : f32 to vector<8x128xf32>
    %116 = arith.addf %115, %114 : vector<8x128xf32>
    %117 = arith.divf %115, %116 : vector<8x128xf32>
    %118 = math.tanh %112 : vector<8x128xf32>
    %119 = vector.extract_strided_slice %117 {offsets = [0, 0], sizes = [8, 32], strides = [1, 1]} : vector<8x128xf32> to vector<8x32xf32>
    %120 = vector.extract_strided_slice %117 {offsets = [0, 32], sizes = [8, 32], strides = [1, 1]} : vector<8x128xf32> to vector<8x32xf32>
    %121 = vector.extract_strided_slice %118 {offsets = [0, 64], sizes = [8, 32], strides = [1, 1]} : vector<8x128xf32> to vector<8x32xf32>
    %122 = vector.extract_strided_slice %117 {offsets = [0, 96], sizes = [8, 32], strides = [1, 1]} : vector<8x128xf32> to vector<8x32xf32>
    %123 = arith.mulf %120, %105 : vector<8x32xf32>
    %124 = arith.mulf %119, %121 : vector<8x32xf32>
    %125 = arith.addf %123, %124 : vector<8x32xf32>
    %126 = math.tanh %125 : vector<8x32xf32>
    %127 = arith.mulf %122, %126 : vector<8x32xf32>
    %128 = vector.extract_strided_slice %5 {offsets = [48, 0], sizes = [8, 128], strides = [1, 1]} : vector<64x128xf32> to vector<8x128xf32>
    %129 = arith.truncf %127 : vector<8x32xf32> to vector<8x32xbf16>
    %c0_33 = arith.constant 0 : index
    %c0_34 = arith.constant 0 : index
    %130 = vector.load %arg2[%c0_33, %c0_34] : memref<32x128xbf16, #tpu.memory_space<vmem>>, vector<32x128xbf16>
    %cst_35 = arith.constant dense<0.000000e+00> : vector<8x128xf32>
    %131 = tpu.matmul %129, %130, %cst_35 {dimension_numbers = #tpu.dot_dimension_numbers<[1], [0], [0], [1], [0, 0, 1, 1], [], []>} : vector<8x32xbf16>, vector<32x128xbf16>, vector<8x128xf32> -> vector<8x128xf32>
    %132 = arith.addf %128, %131 : vector<8x128xf32>
    %133 = arith.negf %132 : vector<8x128xf32>
    %134 = math.exp %133 : vector<8x128xf32>
    %cst_36 = arith.constant 1.000000e+00 : f32
    %135 = vector.broadcast %cst_36 : f32 to vector<8x128xf32>
    %136 = arith.addf %135, %134 : vector<8x128xf32>
    %137 = arith.divf %135, %136 : vector<8x128xf32>
    %138 = math.tanh %132 : vector<8x128xf32>
    %139 = vector.extract_strided_slice %137 {offsets = [0, 0], sizes = [8, 32], strides = [1, 1]} : vector<8x128xf32> to vector<8x32xf32>
    %140 = vector.extract_strided_slice %137 {offsets = [0, 32], sizes = [8, 32], strides = [1, 1]} : vector<8x128xf32> to vector<8x32xf32>
    %141 = vector.extract_strided_slice %138 {offsets = [0, 64], sizes = [8, 32], strides = [1, 1]} : vector<8x128xf32> to vector<8x32xf32>
    %142 = vector.extract_strided_slice %137 {offsets = [0, 96], sizes = [8, 32], strides = [1, 1]} : vector<8x128xf32> to vector<8x32xf32>
    %143 = arith.mulf %140, %125 : vector<8x32xf32>
    %144 = arith.mulf %139, %141 : vector<8x32xf32>
    %145 = arith.addf %143, %144 : vector<8x32xf32>
    %146 = math.tanh %145 : vector<8x32xf32>
    %147 = arith.mulf %142, %146 : vector<8x32xf32>
    %148 = vector.extract_strided_slice %5 {offsets = [56, 0], sizes = [8, 128], strides = [1, 1]} : vector<64x128xf32> to vector<8x128xf32>
    %149 = arith.truncf %147 : vector<8x32xf32> to vector<8x32xbf16>
    %c0_37 = arith.constant 0 : index
    %c0_38 = arith.constant 0 : index
    %150 = vector.load %arg2[%c0_37, %c0_38] : memref<32x128xbf16, #tpu.memory_space<vmem>>, vector<32x128xbf16>
    %cst_39 = arith.constant dense<0.000000e+00> : vector<8x128xf32>
    %151 = tpu.matmul %149, %150, %cst_39 {dimension_numbers = #tpu.dot_dimension_numbers<[1], [0], [0], [1], [0, 0, 1, 1], [], []>} : vector<8x32xbf16>, vector<32x128xbf16>, vector<8x128xf32> -> vector<8x128xf32>
    %152 = arith.addf %148, %151 : vector<8x128xf32>
    %153 = arith.negf %152 : vector<8x128xf32>
    %154 = math.exp %153 : vector<8x128xf32>
    %cst_40 = arith.constant 1.000000e+00 : f32
    %155 = vector.broadcast %cst_40 : f32 to vector<8x128xf32>
    %156 = arith.addf %155, %154 : vector<8x128xf32>
    %157 = arith.divf %155, %156 : vector<8x128xf32>
    %158 = math.tanh %152 : vector<8x128xf32>
    %159 = vector.extract_strided_slice %157 {offsets = [0, 0], sizes = [8, 32], strides = [1, 1]} : vector<8x128xf32> to vector<8x32xf32>
    %160 = vector.extract_strided_slice %157 {offsets = [0, 32], sizes = [8, 32], strides = [1, 1]} : vector<8x128xf32> to vector<8x32xf32>
    %161 = vector.extract_strided_slice %158 {offsets = [0, 64], sizes = [8, 32], strides = [1, 1]} : vector<8x128xf32> to vector<8x32xf32>
    %162 = vector.extract_strided_slice %157 {offsets = [0, 96], sizes = [8, 32], strides = [1, 1]} : vector<8x128xf32> to vector<8x32xf32>
    %163 = arith.mulf %160, %145 : vector<8x32xf32>
    %164 = arith.mulf %159, %161 : vector<8x32xf32>
    %165 = arith.addf %163, %164 : vector<8x32xf32>
    %166 = math.tanh %165 : vector<8x32xf32>
    %167 = arith.mulf %162, %166 : vector<8x32xf32>
    %c0_41 = arith.constant 0 : index
    %c0_42 = arith.constant 0 : index
    %168 = vector.load %arg9[%c0_41, %c0_42] : memref<8x32xf32, #tpu.memory_space<vmem>>, vector<8x32xf32>
    tpu.vector_store %arg9[%c0_41, %c0_42], %167 {strides = array<i32>} : memref<8x32xf32, #tpu.memory_space<vmem>>, vector<8x32xf32>,
    %c0_43 = arith.constant 0 : index
    %c0_44 = arith.constant 0 : index
    %169 = vector.load %arg10[%c0_43, %c0_44] : memref<8x32xf32, #tpu.memory_space<vmem>>, vector<8x32xf32>
    tpu.vector_store %arg10[%c0_43, %c0_44], %165 {strides = array<i32>} : memref<8x32xf32, #tpu.memory_space<vmem>>, vector<8x32xf32>,
    %170 = tpu.concatenate %27, %47, %67, %87, %107, %127, %147, %167 in 0 : vector<8x32xf32>, vector<8x32xf32>, vector<8x32xf32>, vector<8x32xf32>, vector<8x32xf32>, vector<8x32xf32>, vector<8x32xf32>, vector<8x32xf32> -> vector<64x32xf32>
    %171 = arith.truncf %170 : vector<64x32xf32> to vector<64x32xbf16>
    %c0_45 = arith.constant 0 : index
    %c0_46 = arith.constant 0 : index
    %172 = vector.load %arg4[%c0_45, %c0_46] : memref<32x16xbf16, #tpu.memory_space<vmem>>, vector<32x16xbf16>
    %cst_47 = arith.constant dense<0.000000e+00> : vector<64x16xf32>
    %173 = tpu.matmul %171, %172, %cst_47 {dimension_numbers = #tpu.dot_dimension_numbers<[1], [0], [0], [1], [0, 0, 1, 1], [], []>} : vector<64x32xbf16>, vector<32x16xbf16>, vector<64x16xf32> -> vector<64x16xf32>
    %c0_48 = arith.constant 0 : index
    %c0_49 = arith.constant 0 : index
    %174 = vector.load %arg5[%c0_48, %c0_49] : memref<1x16xf32, #tpu.memory_space<vmem>>, vector<1x16xf32>
    %175 = vector.broadcast %174 : vector<1x16xf32> to vector<64x16xf32>
    %176 = arith.addf %173, %175 : vector<64x16xf32>
    %c0_50 = arith.constant 0 : index
    %c0_51 = arith.constant 0 : index
    %177 = vector.load %arg8[%c0_50, %c0_51] : memref<64x16xf32, #tpu.memory_space<vmem>>, vector<64x16xf32>
    tpu.vector_store %arg8[%c0_50, %c0_51], %176 {strides = array<i32>} : memref<64x16xf32, #tpu.memory_space<vmem>>, vector<64x16xf32>,
    return
  }
}

</mosaic_0001>

<llo_original>
// kernel: tpu_custom_call.1
$region0: #{tpu_custom_call.1}
  #allocation0 [shape = 'u32[]', space=smem, size = 0x4, offset = 0x4, fixed_abs, tag = 'smem constant byte address 0x4 - core index']
  #allocation1 [shape = 'u32[144,128]{1,0:T(1,128)}', space=vmem, size = 0x12000, scoped, tag = 'internal scratch']
  %s0 = inlined_call_operand.vmem [shape: bf16[64,16], index: 0, kind: input, shape index: {}]
  %s1 = inlined_call_operand.vmem [shape: bf16[16,128], index: 1, kind: input, shape index: {}]
  %s2 = inlined_call_operand.vmem [shape: bf16[32,128], index: 2, kind: input, shape index: {}]
  %s3 = inlined_call_operand.vmem [shape: f32[1,128], index: 3, kind: input, shape index: {}]
  %s4 = inlined_call_operand.vmem [shape: bf16[32,16], index: 4, kind: input, shape index: {}]
  %s5 = inlined_call_operand.vmem [shape: f32[1,16], index: 5, kind: input, shape index: {}]
  %s6 = inlined_call_operand.vmem [shape: f32[8,32], index: 6, kind: input, shape index: {}]
  %s7 = inlined_call_operand.vmem [shape: f32[8,32], index: 7, kind: input, shape index: {}]
  %s8 = inlined_call_operand.vmem [shape: f32[64,16], index: 8, kind: output, shape index: {0}]
  %s9 = inlined_call_operand.hbm [shape: f32[8,32], index: 9, kind: output, shape index: {1}]
  %s10 = inlined_call_operand.hbm [shape: f32[8,32], index: 10, kind: output, shape index: {2}]
  %11 = xla_tuple %s8, %s9, %s10
  %s12 = sld [smem:[#allocation0]]
  $region58: #{tpu_custom_call.1} parent=0
    _
  %s14 = ssub.s32 1, %s12
  %s15 = scalar_select 0, %s14, %s12
  $region1: #{tpu_custom_call.1} parent=0
    #allocation2 [shape = 'u8[4096]{0}', space=vmem, size = 0x1000, scoped, tag = 'output window, operand 1, single buffered']
    #allocation3 [shape = 's32[1]{0}', space=sflag, size = 0x4, scoped, tag = 'scoped memory for tpu_custom_call.1']
    #allocation4 [shape = 'u8[4096]{0}', space=vmem, size = 0x1000, scoped, tag = 'output window, operand 2, single buffered']
    #allocation5 [shape = 's32[1]{0}', space=sflag, size = 0x4, scoped, tag = 'scoped memory for tpu_custom_call.1']
    %16 = vsyncpa [#allocation3], 0
    %17 = vsyncpa [#allocation5], 0
    // Predicated region
    $region2: #{tpu_custom_call.1} parent=1 // pred_check
      _
    $region3: #{tpu_custom_call.1} parent=1 // pred_check_branch
      %19 = sbr.rel (0) target = $region5
    $region4: #{tpu_custom_call.1} parent=1 // pred_region
      _
    $region5: #{tpu_custom_call.1} parent=1 // pred_fallthru
      _
    // Predicated region
    $region6: #{tpu_custom_call.1} parent=1 // pred_check
      _
    $region7: #{tpu_custom_call.1} parent=1 // pred_check_branch
      %21 = sbr.rel (0) target = $region9
    $region8: #{tpu_custom_call.1} parent=1 // pred_region
      _
    $region9: #{tpu_custom_call.1} parent=1 // pred_fallthru
      _
    // Predicated region
    $region10: #{tpu_custom_call.1} parent=1 // pred_check
      _
    $region11: #{tpu_custom_call.1} parent=1 // pred_check_branch
      %23 = sbr.rel (0) target = $region13
    $region12: #{tpu_custom_call.1} parent=1 // pred_region
      _
    $region13: #{tpu_custom_call.1} parent=1 // pred_fallthru
      _
    // Predicated region
    $region14: #{tpu_custom_call.1} parent=1 // pred_check
      _
    $region15: #{tpu_custom_call.1} parent=1 // pred_check_branch
      %25 = sbr.rel (0) target = $region17
    $region16: #{tpu_custom_call.1} parent=1 // pred_region
      _
    $region17: #{tpu_custom_call.1} parent=1 // pred_fallthru
      _
    // Predicated region
    $region18: #{tpu_custom_call.1} parent=1 // pred_check
      _
    $region19: #{tpu_custom_call.1} parent=1 // pred_check_branch
      %27 = sbr.rel (0) target = $region21
    $region20: #{tpu_custom_call.1} parent=1 // pred_region
      _
    $region21: #{tpu_custom_call.1} parent=1 // pred_fallthru
      _
    // Predicated region
    $region22: #{tpu_custom_call.1} parent=1 // pred_check
      _
    $region23: #{tpu_custom_call.1} parent=1 // pred_check_branch
      %29 = sbr.rel (0) target = $region25
    $region24: #{tpu_custom_call.1} parent=1 // pred_region
      _
    $region25: #{tpu_custom_call.1} parent=1 // pred_fallthru
      _
    // Predicated region
    $region26: #{tpu_custom_call.1} parent=1 // pred_check
      _
    $region27: #{tpu_custom_call.1} parent=1 // pred_check_branch
      %31 = sbr.rel (0) target = $region29
    $region28: #{tpu_custom_call.1} parent=1 // pred_region
      _
    $region29: #{tpu_custom_call.1} parent=1 // pred_fallthru
      _
    // Predicated region
    $region30: #{tpu_custom_call.1} parent=1 // pred_check
      _
    $region31: #{tpu_custom_call.1} parent=1 // pred_check_branch
      %33 = sbr.rel (0) target = $region33
    $region32: #{tpu_custom_call.1} parent=1 // pred_region
      _
    $region33: #{tpu_custom_call.1} parent=1 // pred_fallthru
      _
    %v35 = vld [vmem:[%s0] sm:$0xf]
    %v36 = vld [vmem:[%s0 + $0x4] sm:$0xf]
    %v37 = vld [vmem:[%s0 + $0x8] sm:$0xf]
    %v38 = vld [vmem:[%s0 + $0xc] sm:$0xf]
    %v39 = vld [vmem:[%s0 + $0x10] sm:$0xf]
    %v40 = vld [vmem:[%s0 + $0x14] sm:$0xf]
    %v41 = vld [vmem:[%s0 + $0x18] sm:$0xf]
    %v42 = vld [vmem:[%s0 + $0x1c] sm:$0xf]
    %v43 = vld [vmem:[%s1] sm:$0xf]
    %v44 = vld [vmem:[%s1 + $0x4] sm:$0xf]
    %v45 = vld [vmem:[%s3] sm:$0x1]
    %v47 = vlaneseq
    %v48 = vshrl.u32 %v47, 7
    %v49 = vsub.s32 0, %v48
    %v50 = vrot.slane %v45, %v49
    %v60 = vunpack.c.l.b16 %v35
    %v61 = vunpack.c.l.b16 %v36
    %v62 = vunpack.c.l.b16 %v37
    %v63 = vunpack.c.l.b16 %v38
    %v64 = vunpack.c.l.b16 %v39
    %v65 = vunpack.c.l.b16 %v40
    %v66 = vunpack.c.l.b16 %v41
    %v67 = vunpack.c.l.b16 %v42
    %v68 = vpack.c.b16 %v61, %v60
    %v69 = vpack.c.b16 %v63, %v62
    %v70 = vpack.c.b16 %v65, %v64
    %v71 = vpack.c.b16 %v67, %v66
    %v74 = vunpack.c.l.b16 %v43
    %v75 = vunpack.c.l.b16 %v44
    %v76 = vpack.c.b16 %v75, %v74
    %vm78 = vcmask 130048
    %v80 = vsel %vm78, %v68, 0
    %v83 = vsel %vm78, %v69, 0
    %v86 = vsel %vm78, %v70, 0
    %v89 = vsel %vm78, %v71, 0
    %91 = vmatprep.subr.bf16.mxu0 0
    %92 = vmatpush1.bf16.msra.mxu0 0
    %93 = vmatprep.subr.bf16.mxu0 0
    %94 = vmatpush1.bf16.msra.mxu0 0
    %95 = vmatprep.subr.bf16.mxu0 0
    %96 = vmatpush1.bf16.msra.mxu0 0
    %97 = vmatprep.subr.bf16.mxu0 0
    %98 = vmatpush1.bf16.msra.mxu0 0
    %99 = vmatprep.subr.bf16.mxu0 0
    %100 = vmatpush1.bf16.msra.mxu0 0
    %101 = vmatprep.subr.bf16.mxu0 0
    %102 = vmatpush1.bf16.msra.mxu0 0
    %103 = vmatprep.subr.bf16.mxu0 0
    %104 = vmatpush1.bf16.msra.mxu0 0
    %105 = vmatprep.subr.bf16.mxu0 0
    %106 = vmatpush1.bf16.msra.mxu0 %v76
    %107 = vmatprep.subr.bf16.mxu0 0
    %108 = vmatpush2.bf16.msra.mxu0 0
    %109 = vmatprep.subr.bf16.mxu0 0
    %110 = vmatpush2.bf16.msra.mxu0 0
    %111 = vmatprep.subr.bf16.mxu0 0
    %112 = vmatpush2.bf16.msra.mxu0 0
    %113 = vmatprep.subr.bf16.mxu0 0
    %114 = vmatpush2.bf16.msra.mxu0 0
    %115 = vmatprep.subr.bf16.mxu0 0
    %116 = vmatpush2.bf16.msra.mxu0 0
    %117 = vmatprep.subr.bf16.mxu0 0
    %118 = vmatpush2.bf16.msra.mxu0 0
    %119 = vmatprep.subr.bf16.mxu0 0
    %120 = vmatpush2.bf16.msra.mxu0 0
    %121 = vmatprep.subr.bf16.mxu0 0
    %122 = vmatpush2.bf16.msra.mxu0 0
    %123 = vmatprep.mubr.bf16.mxu0 0
    %124 = vmatmul.mubr.bf16.gmra.mxu0 %v80
    %v125 = vpop.f32.mrf.mxu0
    %v126 = vadd.f32 %v50, %v125
    %v127 = vpop.f32.mrf.mxu0
    %v128 = vpop.f32.mrf.mxu0
    %v129 = vadd.f32 %v50, %v128
    %v130 = vpop.f32.mrf.mxu0
    %131 = vmatprep.mubr.bf16.mxu0 0
    %132 = vmatmul.mubr.bf16.gmra.mxu0 %v83
    %v133 = vpop.f32.mrf.mxu0
    %v134 = vadd.f32 %v50, %v133
    %v135 = vpop.f32.mrf.mxu0
    %v136 = vpop.f32.mrf.mxu0
    %v137 = vadd.f32 %v50, %v136
    %v138 = vpop.f32.mrf.mxu0
    %139 = vmatprep.mubr.bf16.mxu0 0
    %140 = vmatmul.mubr.bf16.gmra.mxu0 %v86
    %v141 = vpop.f32.mrf.mxu0
    %v142 = vadd.f32 %v50, %v141
    %v143 = vpop.f32.mrf.mxu0
    %v144 = vpop.f32.mrf.mxu0
    %v145 = vadd.f32 %v50, %v144
    %v146 = vpop.f32.mrf.mxu0
    %147 = vmatprep.mubr.bf16.mxu0 0
    %148 = vmatmul.mubr.bf16.gmra.mxu0 %v89
    %v149 = vpop.f32.mrf.mxu0
    %v150 = vadd.f32 %v50, %v149
    %v151 = vpop.f32.mrf.mxu0
    %v152 = vpop.f32.mrf.mxu0
    %v153 = vadd.f32 %v50, %v152
    %v154 = vpop.f32.mrf.mxu0
    %155 = vdwg.mxu0
    %v156 = vld [vmem:[%s6] sm:$0xff]
    %v157 = vld [vmem:[%s7] sm:$0xff]
    %v158 = vpack.c.bf16 %v156, %v156
    %v159 = vld [vmem:[%s2] sm:$0xf]
    %v160 = vld [vmem:[%s2 + $0x4] sm:$0xf]
    %v161 = vld [vmem:[%s2 + $0x8] sm:$0xf]
    %v162 = vld [vmem:[%s2 + $0xc] sm:$0xf]
    %v167 = vunpack.c.l.b16 %v159
    %v168 = vunpack.c.l.b16 %v160
    %v169 = vunpack.c.l.b16 %v161
    %v170 = vunpack.c.l.b16 %v162
    %v171 = vpack.c.b16 %v168, %v167
    %v172 = vpack.c.b16 %v170, %v169
    %vm175 = vcmask 261120
    %v177 = vsel %vm175, %v158, 0
    %179 = vmatprep.subr.bf16.mxu0 0
    %180 = vmatpush1.bf16.msra.mxu0 0
    %181 = vmatprep.subr.bf16.mxu0 0
    %182 = vmatpush1.bf16.msra.mxu0 0
    %183 = vmatprep.subr.bf16.mxu0 0
    %184 = vmatpush1.bf16.msra.mxu0 0
    %185 = vmatprep.subr.bf16.mxu0 0
    %186 = vmatpush1.bf16.msra.mxu0 0
    %187 = vmatprep.subr.bf16.mxu0 0
    %188 = vmatpush1.bf16.msra.mxu0 0
    %189 = vmatprep.subr.bf16.mxu0 0
    %190 = vmatpush1.bf16.msra.mxu0 0
    %191 = vmatprep.subr.bf16.mxu0 0
    %192 = vmatpush1.bf16.msra.mxu0 %v172
    %193 = vmatprep.subr.bf16.mxu0 0
    %194 = vmatpush1.bf16.msra.mxu0 %v171
    %195 = vmatprep.subr.bf16.mxu0 0
    %196 = vmatpush2.bf16.msra.mxu0 0
    %197 = vmatprep.subr.bf16.mxu0 0
    %198 = vmatpush2.bf16.msra.mxu0 0
    %199 = vmatprep.subr.bf16.mxu0 0
    %200 = vmatpush2.bf16.msra.mxu0 0
    %201 = vmatprep.subr.bf16.mxu0 0
    %202 = vmatpush2.bf16.msra.mxu0 0
    %203 = vmatprep.subr.bf16.mxu0 0
    %204 = vmatpush2.bf16.msra.mxu0 0
    %205 = vmatprep.subr.bf16.mxu0 0
    %206 = vmatpush2.bf16.msra.mxu0 0
    %207 = vmatprep.subr.bf16.mxu0 0
    %208 = vmatpush2.bf16.msra.mxu0 0
    %209 = vmatprep.subr.bf16.mxu0 0
    %210 = vmatpush2.bf16.msra.mxu0 0
    %211 = vmatprep.mubr.bf16.mxu0 0
    %212 = vmatmul.mubr.bf16.gmra.mxu0 %v177
    %v213 = vpop.f32.mrf.mxu0
    %v214 = vadd.f32 0.0, %v213
    %v215 = vpop.f32.mrf.mxu0
    %v216 = vpop.f32.mrf.mxu0
    %v217 = vpop.f32.mrf.mxu0
    %218 = vdwg.mxu0
    %v219 = vadd.f32 %v126, %v214
    %v220 = vxor.u32 %v219, 2147483648
    %v221 = vmul.f32 %v220, 1.442695
    %v222 = vpow.pop %v221
    %v223 = vadd.f32 %v222, 1.0
    %v224 = vrcp.pop %v223
    %v225 = vmul.f32 1.0, %v224
    %v226 = vtanh.pop %v219
    %228 = vrot.lane.b32.xlu0 %v157, 32
    %v229 = vpop.permute.xlu0 %228
    %v231 = vmul.f32 %v225, %v229
    %233 = vrot.lane.b32.xlu0 %v226, 64
    %v234 = vpop.permute.xlu0 %233
    %v236 = vmul.f32 %v225, %v234
    %238 = vrot.lane.b32.xlu0 %v236, 32
    %v239 = vpop.permute.xlu0 %238
    %v241 = vadd.f32 %v231, %v239
    %v242 = vtanh.pop %v241
    %244 = vrot.lane.b32.xlu0 %v242, 64
    %v245 = vpop.permute.xlu0 %244
    %v247 = vmul.f32 %v225, %v245
    %v248 = vpack.c.bf16 %v247, %v247
    %250 = vrot.lane.b32.xlu0 %v248, 32
    %v251 = vpop.permute.xlu0 %250
    %v253 = vsel %vm175, %v251, 0
    %255 = vmatprep.subr.bf16.mxu0 0
    %256 = vmatpush1.bf16.msra.mxu0 0
    %257 = vmatprep.subr.bf16.mxu0 0
    %258 = vmatpush1.bf16.msra.mxu0 0
    %259 = vmatprep.subr.bf16.mxu0 0
    %260 = vmatpush1.bf16.msra.mxu0 0
    %261 = vmatprep.subr.bf16.mxu0 0
    %262 = vmatpush1.bf16.msra.mxu0 0
    %263 = vmatprep.subr.bf16.mxu0 0
    %264 = vmatpush1.bf16.msra.mxu0 0
    %265 = vmatprep.subr.bf16.mxu0 0
    %266 = vmatpush1.bf16.msra.mxu0 0
    %267 = vmatprep.subr.bf16.mxu0 0
    %268 = vmatpush1.bf16.msra.mxu0 %v172
    %269 = vmatprep.subr.bf16.mxu0 0
    %270 = vmatpush1.bf16.msra.mxu0 %v171
    %271 = vmatprep.subr.bf16.mxu0 0
    %272 = vmatpush2.bf16.msra.mxu0 0
    %273 = vmatprep.subr.bf16.mxu0 0
    %274 = vmatpush2.bf16.msra.mxu0 0
    %275 = vmatprep.subr.bf16.mxu0 0
    %276 = vmatpush2.bf16.msra.mxu0 0
    %277 = vmatprep.subr.bf16.mxu0 0
    %278 = vmatpush2.bf16.msra.mxu0 0
    %279 = vmatprep.subr.bf16.mxu0 0
    %280 = vmatpush2.bf16.msra.mxu0 0
    %281 = vmatprep.subr.bf16.mxu0 0
    %282 = vmatpush2.bf16.msra.mxu0 0
    %283 = vmatprep.subr.bf16.mxu0 0
    %284 = vmatpush2.bf16.msra.mxu0 0
    %285 = vmatprep.subr.bf16.mxu0 0
    %286 = vmatpush2.bf16.msra.mxu0 0
    %287 = vmatprep.mubr.bf16.mxu0 0
    %288 = vmatmul.mubr.bf16.gmra.mxu0 %v253
    %v289 = vpop.f32.mrf.mxu0
    %v290 = vadd.f32 0.0, %v289
    %v291 = vpop.f32.mrf.mxu0
    %v292 = vpop.f32.mrf.mxu0
    %v293 = vpop.f32.mrf.mxu0
    %294 = vdwg.mxu0
    %v295 = vadd.f32 %v129, %v290
    %v296 = vxor.u32 %v295, 2147483648
    %v297 = vmul.f32 %v296, 1.442695
    %v298 = vpow.pop %v297
    %v299 = vadd.f32 %v298, 1.0
    %v300 = vrcp.pop %v299
    %v301 = vmul.f32 1.0, %v300
    %v302 = vtanh.pop %v295
    %v303 = vmul.f32 %v301, %v241
    %305 = vrot.lane.b32.xlu0 %v302, 64
    %v306 = vpop.permute.xlu0 %305
    %v308 = vmul.f32 %v301, %v306
    %310 = vrot.lane.b32.xlu0 %v308, 32
    %v311 = vpop.permute.xlu0 %310
    %v313 = vadd.f32 %v303, %v311
    %v314 = vtanh.pop %v313
    %316 = vrot.lane.b32.xlu0 %v314, 64
    %v317 = vpop.permute.xlu0 %316
    %v319 = vmul.f32 %v301, %v317
    %v320 = vpack.c.bf16 %v319, %v319
    %322 = vrot.lane.b32.xlu0 %v320, 32
    %v323 = vpop.permute.xlu0 %322
    %v325 = vsel %vm175, %v323, 0
    %327 = vmatprep.subr.bf16.mxu0 0
    %328 = vmatpush1.bf16.msra.mxu0 0
    %329 = vmatprep.subr.bf16.mxu0 0
    %330 = vmatpush1.bf16.msra.mxu0 0
    %331 = vmatprep.subr.bf16.mxu0 0
    %332 = vmatpush1.bf16.msra.mxu0 0
    %333 = vmatprep.subr.bf16.mxu0 0
    %334 = vmatpush1.bf16.msra.mxu0 0
    %335 = vmatprep.subr.bf16.mxu0 0
    %336 = vmatpush1.bf16.msra.mxu0 0
    %337 = vmatprep.subr.bf16.mxu0 0
    %338 = vmatpush1.bf16.msra.mxu0 0
    %339 = vmatprep.subr.bf16.mxu0 0
    %340 = vmatpush1.bf16.msra.mxu0 %v172
    %341 = vmatprep.subr.bf16.mxu0 0
    %342 = vmatpush1.bf16.msra.mxu0 %v171
    %343 = vmatprep.subr.bf16.mxu0 0
    %344 = vmatpush2.bf16.msra.mxu0 0
    %345 = vmatprep.subr.bf16.mxu0 0
    %346 = vmatpush2.bf16.msra.mxu0 0
    %347 = vmatprep.subr.bf16.mxu0 0
    %348 = vmatpush2.bf16.msra.mxu0 0
    %349 = vmatprep.subr.bf16.mxu0 0
    %350 = vmatpush2.bf16.msra.mxu0 0
    %351 = vmatprep.subr.bf16.mxu0 0
    %352 = vmatpush2.bf16.msra.mxu0 0
    %353 = vmatprep.subr.bf16.mxu0 0
    %354 = vmatpush2.bf16.msra.mxu0 0
    %355 = vmatprep.subr.bf16.mxu0 0
    %356 = vmatpush2.bf16.msra.mxu0 0
    %357 = vmatprep.subr.bf16.mxu0 0
    %358 = vmatpush2.bf16.msra.mxu0 0
    %359 = vmatprep.mubr.bf16.mxu0 0
    %360 = vmatmul.mubr.bf16.gmra.mxu0 %v325
    %v361 = vpop.f32.mrf.mxu0
    %v362 = vadd.f32 0.0, %v361
    %v363 = vpop.f32.mrf.mxu0
    %v364 = vpop.f32.mrf.mxu0
    %v365 = vpop.f32.mrf.mxu0
    %366 = vdwg.mxu0
    %v367 = vadd.f32 %v134, %v362
    %v368 = vxor.u32 %v367, 2147483648
    %v369 = vmul.f32 %v368, 1.442695
    %v370 = vpow.pop %v369
    %v371 = vadd.f32 %v370, 1.0
    %v372 = vrcp.pop %v371
    %v373 = vmul.f32 1.0, %v372
    %v374 = vtanh.pop %v367
    %v375 = vmul.f32 %v373, %v313
    %377 = vrot.lane.b32.xlu0 %v374, 64
    %v378 = vpop.permute.xlu0 %377
    %v380 = vmul.f32 %v373, %v378
    %382 = vrot.lane.b32.xlu0 %v380, 32
    %v383 = vpop.permute.xlu0 %382
    %v385 = vadd.f32 %v375, %v383
    %v386 = vtanh.pop %v385
    %388 = vrot.lane.b32.xlu0 %v386, 64
    %v389 = vpop.permute.xlu0 %388
    %v391 = vmul.f32 %v373, %v389
    %v392 = vpack.c.bf16 %v391, %v391
    %394 = vrot.lane.b32.xlu0 %v392, 32
    %v395 = vpop.permute.xlu0 %394
    %v397 = vsel %vm175, %v395, 0
    %399 = vmatprep.subr.bf16.mxu0 0
    %400 = vmatpush1.bf16.msra.mxu0 0
    %401 = vmatprep.subr.bf16.mxu0 0
    %402 = vmatpush1.bf16.msra.mxu0 0
    %403 = vmatprep.subr.bf16.mxu0 0
    %404 = vmatpush1.bf16.msra.mxu0 0
    %405 = vmatprep.subr.bf16.mxu0 0
    %406 = vmatpush1.bf16.msra.mxu0 0
    %407 = vmatprep.subr.bf16.mxu0 0
    %408 = vmatpush1.bf16.msra.mxu0 0
    %409 = vmatprep.subr.bf16.mxu0 0
    %410 = vmatpush1.bf16.msra.mxu0 0
    %411 = vmatprep.subr.bf16.mxu0 0
    %412 = vmatpush1.bf16.msra.mxu0 %v172
    %413 = vmatprep.subr.bf16.mxu0 0
    %414 = vmatpush1.bf16.msra.mxu0 %v171
    %415 = vmatprep.subr.bf16.mxu0 0
    %416 = vmatpush2.bf16.msra.mxu0 0
    %417 = vmatprep.subr.bf16.mxu0 0
    %418 = vmatpush2.bf16.msra.mxu0 0
    %419 = vmatprep.subr.bf16.mxu0 0
    %420 = vmatpush2.bf16.msra.mxu0 0
    %421 = vmatprep.subr.bf16.mxu0 0
    %422 = vmatpush2.bf16.msra.mxu0 0
    %423 = vmatprep.subr.bf16.mxu0 0
    %424 = vmatpush2.bf16.msra.mxu0 0
    %425 = vmatprep.subr.bf16.mxu0 0
    %426 = vmatpush2.bf16.msra.mxu0 0
    %427 = vmatprep.subr.bf16.mxu0 0
    %428 = vmatpush2.bf16.msra.mxu0 0
    %429 = vmatprep.subr.bf16.mxu0 0
    %430 = vmatpush2.bf16.msra.mxu0 0
    %431 = vmatprep.mubr.bf16.mxu0 0
    %432 = vmatmul.mubr.bf16.gmra.mxu0 %v397
    %v433 = vpop.f32.mrf.mxu0
    %v434 = vadd.f32 0.0, %v433
    %v435 = vpop.f32.mrf.mxu0
    %v436 = vpop.f32.mrf.mxu0
    %v437 = vpop.f32.mrf.mxu0
    %438 = vdwg.mxu0
    %v439 = vadd.f32 %v137, %v434
    %v440 = vxor.u32 %v439, 2147483648
    %v441 = vmul.f32 %v440, 1.442695
    %v442 = vpow.pop %v441
    %v443 = vadd.f32 %v442, 1.0
    %v444 = vrcp.pop %v443
    %v445 = vmul.f32 1.0, %v444
    %v446 = vtanh.pop %v439
    %v447 = vmul.f32 %v445, %v385
    %449 = vrot.lane.b32.xlu0 %v446, 64
    %v450 = vpop.permute.xlu0 %449
    %v452 = vmul.f32 %v445, %v450
    %454 = vrot.lane.b32.xlu0 %v452, 32
    %v455 = vpop.permute.xlu0 %454
    %v457 = vadd.f32 %v447, %v455
    %v458 = vtanh.pop %v457
    %460 = vrot.lane.b32.xlu0 %v458, 64
    %v461 = vpop.permute.xlu0 %460
    %v463 = vmul.f32 %v445, %v461
    %v464 = vpack.c.bf16 %v463, %v463
    %466 = vrot.lane.b32.xlu0 %v464, 32
    %v467 = vpop.permute.xlu0 %466
    %v469 = vsel %vm175, %v467, 0
    %471 = vmatprep.subr.bf16.mxu0 0
    %472 = vmatpush1.bf16.msra.mxu0 0
    %473 = vmatprep.subr.bf16.mxu0 0
    %474 = vmatpush1.bf16.msra.mxu0 0
    %475 = vmatprep.subr.bf16.mxu0 0
    %476 = vmatpush1.bf16.msra.mxu0 0
    %477 = vmatprep.subr.bf16.mxu0 0
    %478 = vmatpush1.bf16.msra.mxu0 0
    %479 = vmatprep.subr.bf16.mxu0 0
    %480 = vmatpush1.bf16.msra.mxu0 0
    %481 = vmatprep.subr.bf16.mxu0 0
    %482 = vmatpush1.bf16.msra.mxu0 0
    %483 = vmatprep.subr.bf16.mxu0 0
    %484 = vmatpush1.bf16.msra.mxu0 %v172
    %485 = vmatprep.subr.bf16.mxu0 0
    %486 = vmatpush1.bf16.msra.mxu0 %v171
    %487 = vmatprep.subr.bf16.mxu0 0
    %488 = vmatpush2.bf16.msra.mxu0 0
    %489 = vmatprep.subr.bf16.mxu0 0
    %490 = vmatpush2.bf16.msra.mxu0 0
    %491 = vmatprep.subr.bf16.mxu0 0
    %492 = vmatpush2.bf16.msra.mxu0 0
    %493 = vmatprep.subr.bf16.mxu0 0
    %494 = vmatpush2.bf16.msra.mxu0 0
    %495 = vmatprep.subr.bf16.mxu0 0
    %496 = vmatpush2.bf16.msra.mxu0 0
    %497 = vmatprep.subr.bf16.mxu0 0
    %498 = vmatpush2.bf16.msra.mxu0 0
    %499 = vmatprep.subr.bf16.mxu0 0
    %500 = vmatpush2.bf16.msra.mxu0 0
    %501 = vmatprep.subr.bf16.mxu0 0
    %502 = vmatpush2.bf16.msra.mxu0 0
    %503 = vmatprep.mubr.bf16.mxu0 0
    %504 = vmatmul.mubr.bf16.gmra.mxu0 %v469
    %v505 = vpop.f32.mrf.mxu0
    %v506 = vadd.f32 0.0, %v505
    %v507 = vpop.f32.mrf.mxu0
    %v508 = vpop.f32.mrf.mxu0
    %v509 = vpop.f32.mrf.mxu0
    %510 = vdwg.mxu0
    %v511 = vadd.f32 %v142, %v506
    %v512 = vxor.u32 %v511, 2147483648
    %v513 = vmul.f32 %v512, 1.442695
    %v514 = vpow.pop %v513
    %v515 = vadd.f32 %v514, 1.0
    %v516 = vrcp.pop %v515
    %v517 = vmul.f32 1.0, %v516
    %v518 = vtanh.pop %v511
    %v519 = vmul.f32 %v517, %v457
    %521 = vrot.lane.b32.xlu0 %v518, 64
    %v522 = vpop.permute.xlu0 %521
    %v524 = vmul.f32 %v517, %v522
    %526 = vrot.lane.b32.xlu0 %v524, 32
    %v527 = vpop.permute.xlu0 %526
    %v529 = vadd.f32 %v519, %v527
    %v530 = vtanh.pop %v529
    %532 = vrot.lane.b32.xlu0 %v530, 64
    %v533 = vpop.permute.xlu0 %532
    %v535 = vmul.f32 %v517, %v533
    %v536 = vpack.c.bf16 %v535, %v535
    %538 = vrot.lane.b32.xlu0 %v536, 32
    %v539 = vpop.permute.xlu0 %538
    %v541 = vsel %vm175, %v539, 0
    %543 = vmatprep.subr.bf16.mxu0 0
    %544 = vmatpush1.bf16.msra.mxu0 0
    %545 = vmatprep.subr.bf16.mxu0 0
    %546 = vmatpush1.bf16.msra.mxu0 0
    %547 = vmatprep.subr.bf16.mxu0 0
    %548 = vmatpush1.bf16.msra.mxu0 0
    %549 = vmatprep.subr.bf16.mxu0 0
    %550 = vmatpush1.bf16.msra.mxu0 0
    %551 = vmatprep.subr.bf16.mxu0 0
    %552 = vmatpush1.bf16.msra.mxu0 0
    %553 = vmatprep.subr.bf16.mxu0 0
    %554 = vmatpush1.bf16.msra.mxu0 0
    %555 = vmatprep.subr.bf16.mxu0 0
    %556 = vmatpush1.bf16.msra.mxu0 %v172
    %557 = vmatprep.subr.bf16.mxu0 0
    %558 = vmatpush1.bf16.msra.mxu0 %v171
    %559 = vmatprep.subr.bf16.mxu0 0
    %560 = vmatpush2.bf16.msra.mxu0 0
    %561 = vmatprep.subr.bf16.mxu0 0
    %562 = vmatpush2.bf16.msra.mxu0 0
    %563 = vmatprep.subr.bf16.mxu0 0
    %564 = vmatpush2.bf16.msra.mxu0 0
    %565 = vmatprep.subr.bf16.mxu0 0
    %566 = vmatpush2.bf16.msra.mxu0 0
    %567 = vmatprep.subr.bf16.mxu0 0
    %568 = vmatpush2.bf16.msra.mxu0 0
    %569 = vmatprep.subr.bf16.mxu0 0
    %570 = vmatpush2.bf16.msra.mxu0 0
    %571 = vmatprep.subr.bf16.mxu0 0
    %572 = vmatpush2.bf16.msra.mxu0 0
    %573 = vmatprep.subr.bf16.mxu0 0
    %574 = vmatpush2.bf16.msra.mxu0 0
    %575 = vmatprep.mubr.bf16.mxu0 0
    %576 = vmatmul.mubr.bf16.gmra.mxu0 %v541
    %v577 = vpop.f32.mrf.mxu0
    %v578 = vadd.f32 0.0, %v577
    %v579 = vpop.f32.mrf.mxu0
    %v580 = vpop.f32.mrf.mxu0
    %v581 = vpop.f32.mrf.mxu0
    %582 = vdwg.mxu0
    %v583 = vadd.f32 %v145, %v578
    %v584 = vxor.u32 %v583, 2147483648
    %v585 = vmul.f32 %v584, 1.442695
    %v586 = vpow.pop %v585
    %v587 = vadd.f32 %v586, 1.0
    %v588 = vrcp.pop %v587
    %v589 = vmul.f32 1.0, %v588
    %v590 = vtanh.pop %v583
    %v591 = vmul.f32 %v589, %v529
    %593 = vrot.lane.b32.xlu0 %v590, 64
    %v594 = vpop.permute.xlu0 %593
    %v596 = vmul.f32 %v589, %v594
    %598 = vrot.lane.b32.xlu0 %v596, 32
    %v599 = vpop.permute.xlu0 %598
    %v601 = vadd.f32 %v591, %v599
    %v602 = vtanh.pop %v601
    %604 = vrot.lane.b32.xlu0 %v602, 64
    %v605 = vpop.permute.xlu0 %604
    %v607 = vmul.f32 %v589, %v605
    %v608 = vpack.c.bf16 %v607, %v607
    %610 = vrot.lane.b32.xlu0 %v608, 32
    %v611 = vpop.permute.xlu0 %610
    %v613 = vsel %vm175, %v611, 0
    %615 = vmatprep.subr.bf16.mxu0 0
    %616 = vmatpush1.bf16.msra.mxu0 0
    %617 = vmatprep.subr.bf16.mxu0 0
    %618 = vmatpush1.bf16.msra.mxu0 0
    %619 = vmatprep.subr.bf16.mxu0 0
    %620 = vmatpush1.bf16.msra.mxu0 0
    %621 = vmatprep.subr.bf16.mxu0 0
    %622 = vmatpush1.bf16.msra.mxu0 0
    %623 = vmatprep.subr.bf16.mxu0 0
    %624 = vmatpush1.bf16.msra.mxu0 0
    %625 = vmatprep.subr.bf16.mxu0 0
    %626 = vmatpush1.bf16.msra.mxu0 0
    %627 = vmatprep.subr.bf16.mxu0 0
    %628 = vmatpush1.bf16.msra.mxu0 %v172
    %629 = vmatprep.subr.bf16.mxu0 0
    %630 = vmatpush1.bf16.msra.mxu0 %v171
    %631 = vmatprep.subr.bf16.mxu0 0
    %632 = vmatpush2.bf16.msra.mxu0 0
    %633 = vmatprep.subr.bf16.mxu0 0
    %634 = vmatpush2.bf16.msra.mxu0 0
    %635 = vmatprep.subr.bf16.mxu0 0
    %636 = vmatpush2.bf16.msra.mxu0 0
    %637 = vmatprep.subr.bf16.mxu0 0
    %638 = vmatpush2.bf16.msra.mxu0 0
    %639 = vmatprep.subr.bf16.mxu0 0
    %640 = vmatpush2.bf16.msra.mxu0 0
    %641 = vmatprep.subr.bf16.mxu0 0
    %642 = vmatpush2.bf16.msra.mxu0 0
    %643 = vmatprep.subr.bf16.mxu0 0
    %644 = vmatpush2.bf16.msra.mxu0 0
    %645 = vmatprep.subr.bf16.mxu0 0
    %646 = vmatpush2.bf16.msra.mxu0 0
    %647 = vmatprep.mubr.bf16.mxu0 0
    %648 = vmatmul.mubr.bf16.gmra.mxu0 %v613
    %v649 = vpop.f32.mrf.mxu0
    %v650 = vadd.f32 0.0, %v649
    %v651 = vpop.f32.mrf.mxu0
    %v652 = vpop.f32.mrf.mxu0
    %v653 = vpop.f32.mrf.mxu0
    %654 = vdwg.mxu0
    %v655 = vadd.f32 %v150, %v650
    %v656 = vxor.u32 %v655, 2147483648
    %v657 = vmul.f32 %v656, 1.442695
    %v658 = vpow.pop %v657
    %v659 = vadd.f32 %v658, 1.0
    %v660 = vrcp.pop %v659
    %v661 = vmul.f32 1.0, %v660
    %v662 = vtanh.pop %v655
    %v663 = vmul.f32 %v661, %v601
    %665 = vrot.lane.b32.xlu0 %v662, 64
    %v666 = vpop.permute.xlu0 %665
    %v668 = vmul.f32 %v661, %v666
    %670 = vrot.lane.b32.xlu0 %v668, 32
    %v671 = vpop.permute.xlu0 %670
    %v673 = vadd.f32 %v663, %v671
    %v674 = vtanh.pop %v673
    %676 = vrot.lane.b32.xlu0 %v674, 64
    %v677 = vpop.permute.xlu0 %676
    %v679 = vmul.f32 %v661, %v677
    %v680 = vpack.c.bf16 %v679, %v679
    %682 = vrot.lane.b32.xlu0 %v680, 32
    %v683 = vpop.permute.xlu0 %682
    %v685 = vsel %vm175, %v683, 0
    %687 = vmatprep.subr.bf16.mxu0 0
    %688 = vmatpush1.bf16.msra.mxu0 0
    %689 = vmatprep.subr.bf16.mxu0 0
    %690 = vmatpush1.bf16.msra.mxu0 0
    %691 = vmatprep.subr.bf16.mxu0 0
    %692 = vmatpush1.bf16.msra.mxu0 0
    %693 = vmatprep.subr.bf16.mxu0 0
    %694 = vmatpush1.bf16.msra.mxu0 0
    %695 = vmatprep.subr.bf16.mxu0 0
    %696 = vmatpush1.bf16.msra.mxu0 0
    %697 = vmatprep.subr.bf16.mxu0 0
    %698 = vmatpush1.bf16.msra.mxu0 0
    %699 = vmatprep.subr.bf16.mxu0 0
    %700 = vmatpush1.bf16.msra.mxu0 %v172
    %701 = vmatprep.subr.bf16.mxu0 0
    %702 = vmatpush1.bf16.msra.mxu0 %v171
    %703 = vmatprep.subr.bf16.mxu0 0
    %704 = vmatpush2.bf16.msra.mxu0 0
    %705 = vmatprep.subr.bf16.mxu0 0
    %706 = vmatpush2.bf16.msra.mxu0 0
    %707 = vmatprep.subr.bf16.mxu0 0
    %708 = vmatpush2.bf16.msra.mxu0 0
    %709 = vmatprep.subr.bf16.mxu0 0
    %710 = vmatpush2.bf16.msra.mxu0 0
    %711 = vmatprep.subr.bf16.mxu0 0
    %712 = vmatpush2.bf16.msra.mxu0 0
    %713 = vmatprep.subr.bf16.mxu0 0
    %714 = vmatpush2.bf16.msra.mxu0 0
    %715 = vmatprep.subr.bf16.mxu0 0
    %716 = vmatpush2.bf16.msra.mxu0 0
    %717 = vmatprep.subr.bf16.mxu0 0
    %718 = vmatpush2.bf16.msra.mxu0 0
    %719 = vmatprep.mubr.bf16.mxu0 0
    %720 = vmatmul.mubr.bf16.gmra.mxu0 %v685
    %v721 = vpop.f32.mrf.mxu0
    %v722 = vadd.f32 0.0, %v721
    %v723 = vpop.f32.mrf.mxu0
    %v724 = vpop.f32.mrf.mxu0
    %v725 = vpop.f32.mrf.mxu0
    %726 = vdwg.mxu0
    %v727 = vadd.f32 %v153, %v722
    %v728 = vxor.u32 %v727, 2147483648
    %v729 = vmul.f32 %v728, 1.442695
    %v730 = vpow.pop %v729
    %v731 = vadd.f32 %v730, 1.0
    %v732 = vrcp.pop %v731
    %v733 = vmul.f32 1.0, %v732
    %v734 = vtanh.pop %v727
    %v735 = vmul.f32 %v733, %v673
    %737 = vrot.lane.b32.xlu0 %v734, 64
    %v738 = vpop.permute.xlu0 %737
    %v740 = vmul.f32 %v733, %v738
    %742 = vrot.lane.b32.xlu0 %v740, 32
    %v743 = vpop.permute.xlu0 %742
    %v745 = vadd.f32 %v735, %v743
    %v746 = vtanh.pop %v745
    %748 = vrot.lane.b32.xlu0 %v746, 64
    %v749 = vpop.permute.xlu0 %748
    %v751 = vmul.f32 %v733, %v749
    %753 = vrot.lane.b32.xlu0 %v751, 32
    %v754 = vpop.permute.xlu0 %753
    %756 = vst.msk [vmem:[#allocation2] sm:$0xff] %vm175, %v754
    %758 = vrot.lane.b32.xlu0 %v745, 96
    %v759 = vpop.permute.xlu0 %758
    %761 = vst.msk [vmem:[#allocation4] sm:$0xff] %vm175, %v759
    %v762 = vpack.c.bf16 %v319, %v247
    %v763 = vpack.c.bf16 %v463, %v391
    %v764 = vpack.c.bf16 %v607, %v535
    %v765 = vpack.c.bf16 %v751, %v679
    %v766 = vld [vmem:[%s4] sm:$0xf]
    %v767 = vld [vmem:[%s4 + $0x4] sm:$0xf]
    %v768 = vld [vmem:[%s4 + $0x8] sm:$0xf]
    %v769 = vld [vmem:[%s4 + $0xc] sm:$0xf]
    %v770 = vld [vmem:[%s5] sm:$0x1]
    %v772 = vlaneseq
    %v773 = vshrl.u32 %v772, 7
    %v774 = vsub.s32 0, %v773
    %v775 = vrot.slane %v770, %v774
    %781 = vrot.lane.b32.xlu0 %v762, 32
    %v782 = vpop.permute.xlu0 %781
    %783 = vrot.lane.b32.xlu0 %v763, 32
    %v784 = vpop.permute.xlu0 %783
    %785 = vrot.lane.b32.xlu0 %v764, 32
    %v786 = vpop.permute.xlu0 %785
    %787 = vrot.lane.b32.xlu0 %v765, 32
    %v788 = vpop.permute.xlu0 %787
    %v793 = vunpack.c.l.b16 %v766
    %v794 = vunpack.c.l.b16 %v767
    %v795 = vunpack.c.l.b16 %v768
    %v796 = vunpack.c.l.b16 %v769
    %v797 = vpack.c.b16 %v794, %v793
    %v798 = vpack.c.b16 %v796, %v795
    %v802 = vsel %vm175, %v782, 0
    %v805 = vsel %vm175, %v784, 0
    %v808 = vsel %vm175, %v786, 0
    %v811 = vsel %vm175, %v788, 0
    %813 = vmatprep.subr.bf16.mxu0 0
    %814 = vmatpush1.bf16.msra.mxu0 0
    %815 = vmatprep.subr.bf16.mxu0 0
    %816 = vmatpush1.bf16.msra.mxu0 0
    %817 = vmatprep.subr.bf16.mxu0 0
    %818 = vmatpush1.bf16.msra.mxu0 0
    %819 = vmatprep.subr.bf16.mxu0 0
    %820 = vmatpush1.bf16.msra.mxu0 0
    %821 = vmatprep.subr.bf16.mxu0 0
    %822 = vmatpush1.bf16.msra.mxu0 0
    %823 = vmatprep.subr.bf16.mxu0 0
    %824 = vmatpush1.bf16.msra.mxu0 0
    %825 = vmatprep.subr.bf16.mxu0 0
    %826 = vmatpush1.bf16.msra.mxu0 %v798
    %827 = vmatprep.subr.bf16.mxu0 0
    %828 = vmatpush1.bf16.msra.mxu0 %v797
    %829 = vmatprep.subr.bf16.mxu0 0
    %830 = vmatpush2.bf16.msra.mxu0 0
    %831 = vmatprep.subr.bf16.mxu0 0
    %832 = vmatpush2.bf16.msra.mxu0 0
    %833 = vmatprep.subr.bf16.mxu0 0
    %834 = vmatpush2.bf16.msra.mxu0 0
    %835 = vmatprep.subr.bf16.mxu0 0
    %836 = vmatpush2.bf16.msra.mxu0 0
    %837 = vmatprep.subr.bf16.mxu0 0
    %838 = vmatpush2.bf16.msra.mxu0 0
    %839 = vmatprep.subr.bf16.mxu0 0
    %840 = vmatpush2.bf16.msra.mxu0 0
    %841 = vmatprep.subr.bf16.mxu0 0
    %842 = vmatpush2.bf16.msra.mxu0 0
    %843 = vmatprep.subr.bf16.mxu0 0
    %844 = vmatpush2.bf16.msra.mxu0 0
    %845 = vmatprep.mubr.bf16.mxu0 0
    %846 = vmatmul.mubr.bf16.gmra.mxu0 %v802
    %v847 = vpop.f32.mrf.mxu0
    %v848 = vadd.f32 %v775, %v847
    %v849 = vpop.f32.mrf.mxu0
    %v850 = vpop.f32.mrf.mxu0
    %v851 = vadd.f32 %v775, %v850
    %v852 = vpop.f32.mrf.mxu0
    %853 = vmatprep.mubr.bf16.mxu0 0
    %854 = vmatmul.mubr.bf16.gmra.mxu0 %v805
    %v855 = vpop.f32.mrf.mxu0
    %v856 = vadd.f32 %v775, %v855
    %v857 = vpop.f32.mrf.mxu0
    %v858 = vpop.f32.mrf.mxu0
    %v859 = vadd.f32 %v775, %v858
    %v860 = vpop.f32.mrf.mxu0
    %861 = vmatprep.mubr.bf16.mxu0 0
    %862 = vmatmul.mubr.bf16.gmra.mxu0 %v808
    %v863 = vpop.f32.mrf.mxu0
    %v864 = vadd.f32 %v775, %v863
    %v865 = vpop.f32.mrf.mxu0
    %v866 = vpop.f32.mrf.mxu0
    %v867 = vadd.f32 %v775, %v866
    %v868 = vpop.f32.mrf.mxu0
    %869 = vmatprep.mubr.bf16.mxu0 0
    %870 = vmatmul.mubr.bf16.gmra.mxu0 %v811
    %v871 = vpop.f32.mrf.mxu0
    %v872 = vadd.f32 %v775, %v871
    %v873 = vpop.f32.mrf.mxu0
    %v874 = vpop.f32.mrf.mxu0
    %v875 = vadd.f32 %v775, %v874
    %v876 = vpop.f32.mrf.mxu0
    %877 = vdwg.mxu0
    %878 = vst.msk [vmem:[%s8] sm:$0xff] %vm78, %v848
    %879 = vst.msk [vmem:[%s8 + $0x8] sm:$0xff] %vm78, %v851
    %880 = vst.msk [vmem:[%s8 + $0x10] sm:$0xff] %vm78, %v856
    %881 = vst.msk [vmem:[%s8 + $0x18] sm:$0xff] %vm78, %v859
    %882 = vst.msk [vmem:[%s8 + $0x20] sm:$0xff] %vm78, %v864
    %883 = vst.msk [vmem:[%s8 + $0x28] sm:$0xff] %vm78, %v867
    %884 = vst.msk [vmem:[%s8 + $0x30] sm:$0xff] %vm78, %v872
    %885 = vst.msk [vmem:[%s8 + $0x38] sm:$0xff] %vm78, %v875
    // Predicated region
    $region34: #{tpu_custom_call.1} parent=1 // pred_check
      _
    $region35: #{tpu_custom_call.1} parent=1 // pred_check_branch
      %887 = sbr.rel (0) target = $region37
    $region36: #{tpu_custom_call.1} parent=1 // pred_region
      _
    $region37: #{tpu_custom_call.1} parent=1 // pred_fallthru
      _
    // Predicated region
    $region38: #{tpu_custom_call.1} parent=1 // pred_check
      _
    $region39: #{tpu_custom_call.1} parent=1 // pred_check_branch
      %889 = sbr.rel (0) target = $region41
    $region40: #{tpu_custom_call.1} parent=1 // pred_region
      %s891 = ssub.s32 128, 128
      %892 = vsyncadd [#allocation3], %s891
      %s894 = sshll.u32 [#allocation2], 4
      %s895 = int_to_ptr.vmem [resolvable:$true] %s894
      %897 = dma.vmem_to_hbm [thread:$0]  %s895, 128, %s9, [#allocation3]
    $region41: #{tpu_custom_call.1} parent=1 // pred_fallthru
      _
    // Predicated region
    $region42: #{tpu_custom_call.1} parent=1 // pred_check
      _
    $region43: #{tpu_custom_call.1} parent=1 // pred_check_branch
      %899 = sbr.rel (0) target = $region45
    $region44: #{tpu_custom_call.1} parent=1 // pred_region
      %s901 = ssub.s32 128, 128
      %902 = vsyncadd [#allocation5], %s901
      %s904 = sshll.u32 [#allocation4], 4
      %s905 = int_to_ptr.vmem [resolvable:$true] %s904
      %907 = dma.vmem_to_hbm [thread:$0]  %s905, 128, %s10, [#allocation5]
    $region45: #{tpu_custom_call.1} parent=1 // pred_fallthru
      _
    // Predicated region
    $region46: #{tpu_custom_call.1} parent=1 // pred_check
      _
    $region47: #{tpu_custom_call.1} parent=1 // pred_check_branch
      %909 = sbr.rel (0) target = $region49
    $region48: #{tpu_custom_call.1} parent=1 // pred_region
      _
    $region49: #{tpu_custom_call.1} parent=1 // pred_fallthru
      _
    // Predicated region
    $region50: #{tpu_custom_call.1} parent=1 // pred_check
      _
    $region51: #{tpu_custom_call.1} parent=1 // pred_check_branch
      %911 = sbr.rel (0) target = $region53
    $region52: #{tpu_custom_call.1} parent=1 // pred_region
      %912 = dma.done [#allocation3], 128
    $region53: #{tpu_custom_call.1} parent=1 // pred_fallthru
      _
    // Predicated region
    $region54: #{tpu_custom_call.1} parent=1 // pred_check
      _
    $region55: #{tpu_custom_call.1} parent=1 // pred_check_branch
      %914 = sbr.rel (0) target = $region57
    $region56: #{tpu_custom_call.1} parent=1 // pred_region
      %915 = dma.done [#allocation5], 128
    $region57: #{tpu_custom_call.1} parent=1 // pred_fallthru
      _
    %916 = vsyncpa [#allocation3], 1
    %917 = vsyncpa [#allocation5], 1

</llo_original>
